<compile_context>
chip_gen: v5e
topology: v5e:2x2
jax: 0.10.0
libtpu: 0.0.40
codegen_flags: <defaults>
</compile_context>

<pallas_src>
import math

import jax
import jax.numpy as jnp
from jax.experimental import pallas as pl
from jax.experimental.pallas import tpu as pltpu

N_USERS = 6040
N_MOVIES = 3883
EMB_DIM = 15
AUG_DIM = EMB_DIM + 2  # [embedding(15) | bias | one]


def mf_kernel(u_ref, m_ref, o_ref):
    """Fused dot-product + bias add on a lane-dense transposed tile.

    u_ref, m_ref : (AUG_DIM, TILE_B) bf16 in VMEM  (batch on lanes)
    o_ref        : (1, TILE_B)       f32  in VMEM  (lane-dense output row)
    """
    # Widen to f32 on the VPU before multiply/accumulate (v5e has no bf16 VALU;
    # on v6e/v7x the cast is free relative to the DMA).
    u = u_ref[...].astype(jnp.float32)
    m = m_ref[...].astype(jnp.float32)
    o_ref[...] = jnp.sum(u * m, axis=0, keepdims=True)  # sublane reduce over 17 rows


def _choose_tile_b(batch):
    """Pick a tile large enough to amortize the ~0.35us per-step overhead (target
    8192 lanes), but capped so the grid keeps >= ~4 tiles when the batch allows —
    this keeps both v7x TensorCores fed and preserves DMA/compute pipelining.
    Always a multiple of 128 (lane width)."""
    target = 8192
    quarter = -(-batch // 4)                   # ceil(batch / 4)
    quarter = ((quarter + 127) // 128) * 128   # round up to a lane multiple
    return max(128, min(target, quarter))


def classifier_forward(params, users, movie, tile_b=None):
    """params: dict with 'user_aug_t' (17, N_USERS) and 'movie_aug_t' (17, N_MOVIES),
    both bfloat16, already transposed to the lane-dense layout the kernel consumes."""
    B = users.shape[0]
    if tile_b is None:
        tile_b = _choose_tile_b(B)
    assert tile_b % 128 == 0, "tile_b must be a multiple of the 128-lane width"

    n_tiles = pl.cdiv(B, tile_b)
    b_pad = n_tiles * tile_b

    # Pad batch with index 0 (a valid row); padded lanes are sliced off below.
    users_p = jnp.pad(users, (0, b_pad - B))
    movie_p = jnp.pad(movie, (0, b_pad - B))

    # Column-gather from the pre-transposed bf16 tables: lands directly in the
    # lane-dense (AUG_DIM, b_pad) layout — no separate transpose HBM pass.
    ue_t = jnp.take(params["user_aug_t"], users_p, axis=1)    # (17, b_pad) bf16
    me_t = jnp.take(params["movie_aug_t"], movie_p, axis=1)   # (17, b_pad) bf16

    out = pl.pallas_call(
        mf_kernel,
        out_shape=jax.ShapeDtypeStruct((1, b_pad), jnp.float32),
        grid=(n_tiles,),
        in_specs=[
            pl.BlockSpec((AUG_DIM, tile_b), lambda i: (0, i)),
            pl.BlockSpec((AUG_DIM, tile_b), lambda i: (0, i)),
        ],
        out_specs=pl.BlockSpec((1, tile_b), lambda i: (0, i)),
        compiler_params=pltpu.CompilerParams(
            dimension_semantics=("parallel",),
        ),
    )(ue_t, me_t)                                             # (1, b_pad) f32

    return out[0, :B].reshape(B, 1)


def xavier_normal(key, shape):
    # Matches torch.nn.init.xavier_normal_ for 2-D weights:
    # fan_in = shape[1], fan_out = shape[0], std = sqrt(2 / (fan_in + fan_out))
    fan_out, fan_in = shape
    std = math.sqrt(2.0 / (fan_in + fan_out))
    return std * jax.random.normal(key, shape, dtype=jnp.float32)


def init_raw_params(key):
    k0, k1, k2, k3 = jax.random.split(key, 4)
    return {
        "usersemb": xavier_normal(k0, (N_USERS, EMB_DIM)),
        "usersbia": xavier_normal(k1, (N_USERS, 1)),
        "movieemb": xavier_normal(k2, (N_MOVIES, EMB_DIM)),
        "moviebia": xavier_normal(k3, (N_MOVIES, 1)),
    }


def prepare_params(raw, dtype=jnp.bfloat16):
    """One-time prep: fold biases into augmented 17-column tables, transpose to the
    lane-dense (AUG_DIM, N) layout, and store in bf16 (halves HBM traffic of the
    gather + kernel; in-kernel accumulation stays f32)."""
    user_aug = jnp.concatenate(
        [raw["usersemb"], raw["usersbia"], jnp.ones((N_USERS, 1), jnp.float32)],
        axis=1,
    )  # (N_USERS, 17): [emb | bias | 1]
    movie_aug = jnp.concatenate(
        [raw["movieemb"], jnp.ones((N_MOVIES, 1), jnp.float32), raw["moviebia"]],
        axis=1,
    )  # (N_MOVIES, 17): [emb | 1 | bias]
    return {
        "user_aug_t": user_aug.T.astype(dtype),     # (17, N_USERS)
        "movie_aug_t": movie_aug.T.astype(dtype),   # (17, N_MOVIES)
    }


def reference_forward(raw, users, movie):
    """Pure-JAX reference on the original f32 parameters."""
    ue = raw["usersemb"][users]
    me = raw["movieemb"][movie]
    out = raw["usersbia"][users] + raw["moviebia"][movie]
    return out + jnp.sum(ue * me, axis=1, keepdims=True)


def reference_forward_from_aug(params, users, movie):
    """Pure-JAX reference on the SAME bf16 augmented tables (tight kernel check)."""
    ue = params["user_aug_t"].astype(jnp.float32)[:, users]   # (17, B)
    me = params["movie_aug_t"].astype(jnp.float32)[:, movie]  # (17, B)
    return jnp.sum(ue * me, axis=0).reshape(-1, 1)


if __name__ == "__main__":
    key = jax.random.PRNGKey(0)
    pkey, ukey, mkey = jax.random.split(key, 3)

    raw = init_raw_params(pkey)
    params = prepare_params(raw)

    # Small demo batch; auto tile_b picks 128 here -> multiple grid steps + padding.
    B = 300
    users = jax.random.randint(ukey, (B,), 0, N_USERS, dtype=jnp.int32)
    movie = jax.random.randint(mkey, (B,), 0, N_MOVIES, dtype=jnp.int32)

    out = classifier_forward(params, users, movie)
    out = jax.block_until_ready(out)
    assert out.shape == (B, 1)

    # Tight check: kernel vs a pure-JAX reference built from the SAME bf16 tables
    # (verifies kernel math / layout exactly, independent of bf16 quantization).
    ref_q = reference_forward_from_aug(params, users, movie)
    assert jnp.allclose(out, ref_q, atol=1e-5, rtol=1e-5)

    # Loose check: vs the original f32 parameters (drift = bf16 rounding of tables).
    ref = reference_forward(raw, users, movie)
    assert jnp.allclose(out, ref, atol=5e-3, rtol=5e-3)

    print("KERNEL_OK")
</pallas_src>

<mosaic_0001>
module attributes {stable_mosaic.version = 11 : i64} {
  func.func @mf_kernel(%arg0: i32, %arg1: memref<17x128xbf16, #tpu.memory_space<vmem>>, %arg2: memref<17x128xbf16, #tpu.memory_space<vmem>>, %arg3: memref<1x128xf32, #tpu.memory_space<vmem>>) attributes {dimension_semantics = [#tpu.dimension_semantics<parallel>], iteration_bounds = array<i64: 3>, scalar_prefetch = 0 : i64, scratch_operands = 0 : i64, tpu.core_type = #tpu.core_type<tc>, window_params = [{transform_indices = @transform_0, window_bounds = array<i64: 17, 128>}, {transform_indices = @transform_1, window_bounds = array<i64: 17, 128>}, {transform_indices = @transform_2, window_bounds = array<i64: 1, 128>}]} {
    %c0 = arith.constant 0 : index
    %c0_0 = arith.constant 0 : index
    %0 = vector.load %arg1[%c0, %c0_0] : memref<17x128xbf16, #tpu.memory_space<vmem>>, vector<17x128xbf16>
    %1 = arith.extf %0 : vector<17x128xbf16> to vector<17x128xf32>
    %c0_1 = arith.constant 0 : index
    %c0_2 = arith.constant 0 : index
    %2 = vector.load %arg2[%c0_1, %c0_2] : memref<17x128xbf16, #tpu.memory_space<vmem>>, vector<17x128xbf16>
    %3 = arith.extf %2 : vector<17x128xbf16> to vector<17x128xf32>
    %4 = arith.mulf %1, %3 : vector<17x128xf32>
    %cst = arith.constant dense<0.000000e+00> : vector<128xf32>
    %5 = vector.multi_reduction <add>, %4, %cst [0] : vector<17x128xf32> to vector<128xf32>
    %6 = vector.shape_cast %5 : vector<128xf32> to vector<1x128xf32>
    %c0_3 = arith.constant 0 : index
    %c0_4 = arith.constant 0 : index
    %7 = vector.load %arg3[%c0_3, %c0_4] : memref<1x128xf32, #tpu.memory_space<vmem>>, vector<1x128xf32>
    tpu.vector_store %arg3[%c0_3, %c0_4], %6 {strides = array<i32>} : memref<1x128xf32, #tpu.memory_space<vmem>>, vector<1x128xf32>,
    return
  }
  func.func @transform_0(%arg0: i32) -> (i32, i32) {
    %c0_i32 = arith.constant 0 : i32
    %c0_i32_0 = arith.constant 0 : i32
    return %c0_i32, %arg0 : i32, i32
  }
  func.func @transform_1(%arg0: i32) -> (i32, i32) {
    %c0_i32 = arith.constant 0 : i32
    %c0_i32_0 = arith.constant 0 : i32
    return %c0_i32, %arg0 : i32, i32
  }
  func.func @transform_2(%arg0: i32) -> (i32, i32) {
    %c0_i32 = arith.constant 0 : i32
    %c0_i32_0 = arith.constant 0 : i32
    return %c0_i32, %arg0 : i32, i32
  }
}

</mosaic_0001>

<llo_original>
// kernel: tpu_custom_call.1
$region0: #{tpu_custom_call.1}
  #allocation0 [shape = 'u32[]', space=smem, size = 0x4, offset = 0x4, fixed_abs, tag = 'smem constant byte address 0x4 - core index']
  #allocation1 [shape = 'u32[72,128]{1,0:T(1,128)}', space=vmem, size = 0x9000, scoped, tag = 'internal scratch']
  %s0 = inlined_call_operand.hbm [shape: bf16[17,384], index: 0, kind: input, shape index: {}]
  %s1 = inlined_call_operand.hbm [shape: bf16[17,384], index: 1, kind: input, shape index: {}]
  %s2 = inlined_call_operand.hbm [shape: f32[1,384], index: 2, kind: output, shape index: {}]
  %s3 = sld [smem:[#allocation0]]
  $region49: #{tpu_custom_call.1} parent=0
    _
  %s5 = ssub.s32 1, %s3
  %s6 = scalar_select 0, %s5, %s3
  $region1: #{tpu_custom_call.1} parent=0
    #allocation2 [shape = 'u8[12288]{0}', space=vmem, size = 0x3000, scoped, tag = 'input window, operand 0']
    #allocation3 [shape = 's32[2]{0}', space=sflag, size = 0x8, scoped, tag = 'scoped memory for tpu_custom_call.1']
    #allocation4 [shape = 's32[2]{0}', space=sflag, size = 0x8, scoped, tag = 'scoped memory for tpu_custom_call.1']
    #allocation5 [shape = 'u8[12288]{0}', space=vmem, size = 0x3000, scoped, tag = 'input window, operand 1']
    #allocation6 [shape = 's32[2]{0}', space=sflag, size = 0x8, scoped, tag = 'scoped memory for tpu_custom_call.1']
    #allocation7 [shape = 'u8[1024]{0}', space=vmem, size = 0x400, scoped, tag = 'output window, operand 0']
    %7 = vsyncpa [#allocation3], 0
    %s8 = scalar_lea.sflag [#allocation3], 1
    %9 = vsyncpa %s8, 0
    %10 = vsyncpa [#allocation6], 0
    %s11 = scalar_lea.sflag [#allocation6], 1
    %12 = vsyncpa %s11, 0
    %13 = vsyncpa [#allocation4], 0
    %s14 = scalar_lea.sflag [#allocation4], 1
    %15 = vsyncpa %s14, 0
    loop: start=0, step=1, limit=5
    $region2: #{tpu_custom_call.1} parent=1 // loop_pre_header
      _
    $region3: #{tpu_custom_call.1} parent=1 // loop_header
      %s17 = sphi 0, %s21
      %p18 = scmp.ge.s32.totalorder %s17, 5
      %s27 = sphi 0, %s29
      %s30 = sphi 0, %s27
      %s31 = sphi 0, %s30
      %s47 = sphi 0, %s31
      %s53 = sphi 0, %s55
      %s56 = sphi 0, %s53
      %s57 = sphi 0, %s56
      %s73 = sphi 0, %s57
      %s79 = sphi 0, %s81
      %s82 = sphi 0, %s79
      %s83 = sphi 0, %s82
      %s99 = sphi 0, %s83
    $region4: #{tpu_custom_call.1} parent=1 // loop_header_branch
      %20 = sbr.rel (%p18) target = $region8
    $region5: #{tpu_custom_call.1} parent=1 // loop_body
      %s22 = ssub.s32 %s17, 1
      %s23 = ssub.s32 %s17, 2
      %s24 = sadd.s32 %s17, 1
      %s25 = ssub.s32 %s17, %s24
      %p26 = scmp.eq.s32.totalorder %s25, 0
      %s28 = sadd.s32 %s27, 1
      %s29 = scalar_select %p26, %s27, %s28
      %p32 = pneg %p26
      %p33 = scmp.eq.s32.totalorder %s17, 2
      %p34 = por %p32, %p33
      %p35 = scmp.ne.s32.totalorder %s27, %s30
      %p36 = scmp.eq.s32.totalorder %s17, 0
      %p37 = por %p35, %p36
      %p38 = scmp.ne.s32.totalorder %s27, %s30
      %p39 = scmp.eq.s32.totalorder %s22, 2
      %p40 = por %p38, %p39
      %p41 = scmp.ne.s32.totalorder %s30, %s31
      %p42 = scmp.eq.s32.totalorder %s22, 0
      %p43 = por %p41, %p42
      %p44 = scmp.ne.s32.totalorder %s30, %s31
      %p45 = scmp.eq.s32.totalorder %s23, 2
      %p46 = por %p44, %p45
      %p48 = scmp.ne.s32.totalorder %s31, %s47
      %p49 = scmp.eq.s32.totalorder %s23, 0
      %p50 = por %p48, %p49
      %s51 = ssub.s32 %s17, %s24
      %p52 = scmp.eq.s32.totalorder %s51, 0
      %s54 = sadd.s32 %s53, 1
      %s55 = scalar_select %p52, %s53, %s54
      %p58 = pneg %p52
      %p59 = scmp.eq.s32.totalorder %s17, 2
      %p60 = por %p58, %p59
      %p61 = scmp.ne.s32.totalorder %s53, %s56
      %p62 = scmp.eq.s32.totalorder %s17, 0
      %p63 = por %p61, %p62
      %p64 = scmp.ne.s32.totalorder %s53, %s56
      %p65 = scmp.eq.s32.totalorder %s22, 2
      %p66 = por %p64, %p65
      %p67 = scmp.ne.s32.totalorder %s56, %s57
      %p68 = scmp.eq.s32.totalorder %s22, 0
      %p69 = por %p67, %p68
      %p70 = scmp.ne.s32.totalorder %s56, %s57
      %p71 = scmp.eq.s32.totalorder %s23, 2
      %p72 = por %p70, %p71
      %p74 = scmp.ne.s32.totalorder %s57, %s73
      %p75 = scmp.eq.s32.totalorder %s23, 0
      %p76 = por %p74, %p75
      %s77 = ssub.s32 %s17, %s24
      %p78 = scmp.eq.s32.totalorder %s77, 0
      %s80 = sadd.s32 %s79, 1
      %s81 = scalar_select %p78, %s79, %s80
      %p84 = pneg %p78
      %p85 = scmp.eq.s32.totalorder %s17, 2
      %p86 = por %p84, %p85
      %p87 = scmp.ne.s32.totalorder %s79, %s82
      %p88 = scmp.eq.s32.totalorder %s17, 0
      %p89 = por %p87, %p88
      %p90 = scmp.ne.s32.totalorder %s79, %s82
      %p91 = scmp.eq.s32.totalorder %s22, 2
      %p92 = por %p90, %p91
      %p93 = scmp.ne.s32.totalorder %s82, %s83
      %p94 = scmp.eq.s32.totalorder %s22, 0
      %p95 = por %p93, %p94
      %p96 = scmp.ne.s32.totalorder %s82, %s83
      %p97 = scmp.eq.s32.totalorder %s23, 2
      %p98 = por %p96, %p97
      %p100 = scmp.ne.s32.totalorder %s83, %s99
      %p101 = scmp.eq.s32.totalorder %s23, 0
      %p102 = por %p100, %p101
      %p103 = scmp.le.s32.totalorder 1, %s17
      %p104 = scmp.lt.s32.totalorder %s17, 4
      %p105 = pnand %p103, %p104
      %p106 = pneg %p105
      // Predicated region
      $region9: #{tpu_custom_call.1} parent=5 // pred_check
        _
      $region10: #{tpu_custom_call.1} parent=5 // pred_check_branch
        %108 = sbr.rel (%p105) target = $region12
      $region11: #{tpu_custom_call.1} parent=5 // pred_region
        %s109 = ssub.s32 %s17, 1
      $region12: #{tpu_custom_call.1} parent=5 // pred_fallthru
        _
      %p110 = scmp.lt.s32.totalorder %s17, 3
      // Predicated region
      $region13: #{tpu_custom_call.1} parent=5 // pred_check
        %p111 = pneg %p110
      $region14: #{tpu_custom_call.1} parent=5 // pred_check_branch
        %113 = sbr.rel (%p111) target = $region16
      $region15: #{tpu_custom_call.1} parent=5 // pred_region
        // Predicated region
        $region17: #{tpu_custom_call.1} parent=15 // pred_check
          %p114 = pneg %p37
        $region18: #{tpu_custom_call.1} parent=15 // pred_check_branch
          %116 = sbr.rel (%p114) target = $region20
        $region19: #{tpu_custom_call.1} parent=15 // pred_region
          %s117 = sand.u32 %s27, 1
          %s118 = scalar_lea.sflag [#allocation3], %s117
          %s119 = sand.u32 %s27, 1
          %s120 = smul.addr %s119, 12
          %s121 = scalar_lea.vmem [#allocation2], %s120
          %123 = vsyncadd %s118, 0
          %s124 = smul.addr %s17, 4
          %s125 = scalar_lea.hbm %s0, %s124
          %s126 = sshll.u32 %s125, 4
          %s127 = int_to_ptr.hbm [resolvable:$true] %s126
          %s128 = sshll.u32 %s121, 4
          %s129 = int_to_ptr.vmem [resolvable:$true] %s128
          %134 = dma.hbm_to_vmem [thread:$0]  %s127, 192, %s129, %s118, 192, 64, 4
        $region20: #{tpu_custom_call.1} parent=15 // pred_fallthru
          _
        // Predicated region
        $region21: #{tpu_custom_call.1} parent=15 // pred_check
          %p135 = pneg %p63
        $region22: #{tpu_custom_call.1} parent=15 // pred_check_branch
          %137 = sbr.rel (%p135) target = $region24
        $region23: #{tpu_custom_call.1} parent=15 // pred_region
          %s138 = sand.u32 %s53, 1
          %s139 = scalar_lea.sflag [#allocation6], %s138
          %s140 = sand.u32 %s53, 1
          %s141 = smul.addr %s140, 12
          %s142 = scalar_lea.vmem [#allocation5], %s141
          %144 = vsyncadd %s139, 0
          %s145 = smul.addr %s17, 4
          %s146 = scalar_lea.hbm %s1, %s145
          %s147 = sshll.u32 %s146, 4
          %s148 = int_to_ptr.hbm [resolvable:$true] %s147
          %s149 = sshll.u32 %s142, 4
          %s150 = int_to_ptr.vmem [resolvable:$true] %s149
          %155 = dma.hbm_to_vmem [thread:$0]  %s148, 192, %s150, %s139, 192, 64, 4
        $region24: #{tpu_custom_call.1} parent=15 // pred_fallthru
          _
      $region16: #{tpu_custom_call.1} parent=5 // pred_fallthru
        _
      %p156 = scmp.le.s32.totalorder 1, %s17
      %p157 = scmp.lt.s32.totalorder %s17, 4
      %p158 = pnand %p156, %p157
      %p159 = pneg %p158
      // Predicated region
      $region25: #{tpu_custom_call.1} parent=5 // pred_check
        _
      $region26: #{tpu_custom_call.1} parent=5 // pred_check_branch
        %161 = sbr.rel (%p158) target = $region28
      $region27: #{tpu_custom_call.1} parent=5 // pred_region
        %s162 = ssub.s32 %s17, 1
        %s163 = sand.u32 %s30, 1
        %s164 = scalar_lea.sflag [#allocation3], %s163
        %s165 = sand.u32 %s30, 1
        %s166 = smul.addr %s165, 12
        %s167 = scalar_lea.vmem [#allocation2], %s166
        // Predicated region
        $region29: #{tpu_custom_call.1} parent=27 // pred_check
          %p168 = pneg %p43
        $region30: #{tpu_custom_call.1} parent=27 // pred_check_branch
          %170 = sbr.rel (%p168) target = $region32
        $region31: #{tpu_custom_call.1} parent=27 // pred_region
          %172 = dma.done %s164, 192
        $region32: #{tpu_custom_call.1} parent=27 // pred_fallthru
          _
        %s173 = sand.u32 %s56, 1
        %s174 = scalar_lea.sflag [#allocation6], %s173
        %s175 = sand.u32 %s56, 1
        %s176 = smul.addr %s175, 12
        %s177 = scalar_lea.vmem [#allocation5], %s176
        // Predicated region
        $region33: #{tpu_custom_call.1} parent=27 // pred_check
          %p178 = pneg %p69
        $region34: #{tpu_custom_call.1} parent=27 // pred_check_branch
          %180 = sbr.rel (%p178) target = $region36
        $region35: #{tpu_custom_call.1} parent=27 // pred_region
          %182 = dma.done %s174, 192
        $region36: #{tpu_custom_call.1} parent=27 // pred_fallthru
          _
        %s183 = sand.u32 %s30, 1
        %s184 = scalar_lea.sflag [#allocation3], %s183
        %s185 = sand.u32 %s30, 1
        %s186 = smul.addr %s185, 12
        %s187 = scalar_lea.vmem [#allocation2], %s186
        %p188 = pneg %p43
        %p189 = pneg %p40
        %s190 = sand.u32 %s56, 1
        %s191 = scalar_lea.sflag [#allocation6], %s190
        %s192 = sand.u32 %s56, 1
        %s193 = smul.addr %s192, 12
        %s194 = scalar_lea.vmem [#allocation5], %s193
        %p195 = pneg %p69
        %p196 = pneg %p66
        %p197 = pneg %p95
        %p198 = pneg %p92
        %s199 = sand.u32 %s82, 1
        %s200 = scalar_lea.sflag [#allocation4], %s199
        %s201 = sand.u32 %s82, 1
        %s202 = scalar_lea.vmem [#allocation7], %s201
        %v203 = vld [vmem:[%s167] sm:$0xf]
        %v204 = vld [vmem:[%s167 + $0x4] sm:$0xf]
        %v205 = vld [vmem:[%s167 + $0x8] sm:$0x1]
        %v206 = vunpack.c.l.bf16 %v203
        %v207 = vunpack.c.l.bf16 %v204
        %v208 = vunpack.c.l.bf16 %v205
        %v209 = vld [vmem:[%s177] sm:$0xf]
        %v210 = vld [vmem:[%s177 + $0x4] sm:$0xf]
        %v211 = vld [vmem:[%s177 + $0x8] sm:$0x1]
        %v212 = vunpack.c.l.bf16 %v209
        %v213 = vunpack.c.l.bf16 %v210
        %v214 = vunpack.c.l.bf16 %v211
        %v215 = vmul.f32 %v206, %v212
        %v216 = vmul.f32 %v207, %v213
        %v217 = vmul.f32 %v208, %v214
        %v218 = vadd.f32 %v215, %v216
        %vm219 = vcmask 1040384
        %v220 = vsel %vm219, %v217, 0.0
        %v221 = vadd.f32 %v218, %v220
        %v222 = vrot.slane %v221, 4
        %v223 = vadd.f32 %v221, %v222
        %v224 = vrot.slane %v223, 2
        %v225 = vadd.f32 %v223, %v224
        %v226 = vrot.slane %v225, 1
        %v227 = vadd.f32 %v225, %v226
        %228 = vst [vmem:[%s202] sm:$0x1] %v227
        %s229 = sand.u32 %s82, 1
        %s230 = scalar_lea.sflag [#allocation4], %s229
        %s231 = sand.u32 %s82, 1
        %s232 = scalar_lea.vmem [#allocation7], %s231
        // Predicated region
        $region37: #{tpu_custom_call.1} parent=27 // pred_check
          %p233 = pneg %p92
        $region38: #{tpu_custom_call.1} parent=27 // pred_check_branch
          %235 = sbr.rel (%p233) target = $region40
        $region39: #{tpu_custom_call.1} parent=27 // pred_region
          %237 = vsyncadd %s230, 0
          %s238 = scalar_lea.hbm %s2, %s22
          %s240 = sshll.u32 %s232, 4
          %s241 = int_to_ptr.vmem [resolvable:$true] %s240
          %s242 = sshll.u32 %s238, 4
          %s243 = int_to_ptr.hbm [resolvable:$true] %s242
          %245 = dma.vmem_to_hbm [thread:$0]  %s241, 16, %s243, %s230
        $region40: #{tpu_custom_call.1} parent=27 // pred_fallthru
          _
      $region28: #{tpu_custom_call.1} parent=5 // pred_fallthru
        _
      %p246 = scmp.le.s32.totalorder 2, %s17
      // Predicated region
      $region41: #{tpu_custom_call.1} parent=5 // pred_check
        %p247 = pneg %p246
      $region42: #{tpu_custom_call.1} parent=5 // pred_check_branch
        %249 = sbr.rel (%p247) target = $region44
      $region43: #{tpu_custom_call.1} parent=5 // pred_region
        %s250 = ssub.s32 %s17, 2
        // Predicated region
        $region45: #{tpu_custom_call.1} parent=43 // pred_check
          %p251 = pneg %p98
        $region46: #{tpu_custom_call.1} parent=43 // pred_check_branch
          %253 = sbr.rel (%p251) target = $region48
        $region47: #{tpu_custom_call.1} parent=43 // pred_region
          %s254 = sand.u32 %s83, 1
          %s255 = scalar_lea.sflag [#allocation4], %s254
          %s256 = sand.u32 %s83, 1
          %s257 = scalar_lea.vmem [#allocation7], %s256
          %259 = dma.done %s255, 16
        $region48: #{tpu_custom_call.1} parent=43 // pred_fallthru
          _
      $region44: #{tpu_custom_call.1} parent=5 // pred_fallthru
        _
    $region6: #{tpu_custom_call.1} parent=1 // loop_footer
      %s21 = sadd.s32 1, %s17
    $region7: #{tpu_custom_call.1} parent=1 // loop_footer_branch
      %16 = sbr.rel target = $region3
    $region8: #{tpu_custom_call.1} parent=1 // loop_exit
      _
    %260 = vsyncpa [#allocation3], 1
    %s261 = scalar_lea.sflag [#allocation3], 1
    %262 = vsyncpa %s261, 1
    %263 = vsyncpa [#allocation6], 1
    %s264 = scalar_lea.sflag [#allocation6], 1
    %265 = vsyncpa %s264, 1
    %266 = vsyncpa [#allocation4], 1
    %s267 = scalar_lea.sflag [#allocation4], 1
    %268 = vsyncpa %s267, 1

</llo_original>
